<compile_context>
chip_gen: v7x
topology: tpu7x:2x2x1
jax: 0.10.0
libtpu: 0.0.40
codegen_flags: <defaults>
</compile_context>

<pallas_src>
import numpy as np
import jax
import jax.numpy as jnp
from jax.experimental import pallas as pl
from jax.experimental.pallas import tpu as pltpu

_LANE = 128


def _pool_params(in_hw, output_shape):
    """Reproduce the PyTorch module's kernel/stride derivation exactly."""
    shape = np.array(in_hw, dtype=np.float64)
    scale = shape / np.array(output_shape, dtype=np.float64)
    stride = tuple(int(s) for s in np.floor(scale))
    kernel_size = tuple(int(s) for s in np.ceil(scale))
    # torch max_pool2d (padding=0, dilation=1, ceil_mode=False) output size.
    out_hw = tuple((in_hw[i] - kernel_size[i]) // stride[i] + 1 for i in range(2))
    return kernel_size, stride, out_hw


def _round_up(x, m):
    return ((x + m - 1) // m) * m


def _choose_nc_tile(H, W, OH, OW, nc_pad, itemsize,
                    budget_bytes=12 * 1024 * 1024):
    """Largest lane tile (multiple of 128) fitting a conservative VMEM budget.

    Budget stays under the 16 MiB scoped default (v5e) / 32 MiB (v6e/v7x):
    double-buffered input block + double-buffered output block + row scratch.
    """
    per_lane = itemsize * (2 * H * W + 2 * OH * OW + W)
    tile = (budget_bytes // (per_lane * _LANE)) * _LANE
    tile = max(_LANE, min(tile, nc_pad))
    while nc_pad % tile:          # nc_pad is a multiple of 128, so this terminates
        tile -= _LANE
    return tile


def _make_maxpool_kernel(KH, KW, SH, SW, OH, OW):
    """Max-pool on a (H, W, NC_TILE) VMEM block, writing (OH, OW, NC_TILE)."""

    def kernel(x_ref, o_ref, row_scratch):
        def kw_read(kw):
            if SW == 1:
                return row_scratch[pl.ds(kw, OW), :]
            return row_scratch[pl.ds(kw, OW, stride=SW), :]

        rows = []
        # OH is small for ROI pooling; static unroll keeps the single dense
        # output store.  TODO(synk): switch to lax.fori_loop over oh with
        # per-row stores if OH ever gets large.
        for oh in range(OH):
            # KH reduction: elementwise max of full-width rows (lane-parallel VPU).
            rm = x_ref[oh * SH]
            for kh in range(1, KH):
                rm = jnp.maximum(rm, x_ref[oh * SH + kh])
            row_scratch[...] = rm
            # KW reduction: strided sublane reads, elementwise max (no XLU reduce).
            col = kw_read(0)
            for kw in range(1, KW):
                col = jnp.maximum(col, kw_read(kw))
            rows.append(col)                       # (OW, NC_TILE)
        # One lane-dense, full-slab store.
        o_ref[...] = jnp.stack(rows, axis=0)       # (OH, OW, NC_TILE)

    return kernel


def roi_pooling(x, output_shape):
    """Pallas equivalent of ROIPooling.forward for an NCHW float input."""
    N, C, H, W = x.shape
    (KH, KW), (SH, SW), (OH, OW) = _pool_params((H, W), output_shape)
    NC = N * C
    itemsize = jnp.dtype(x.dtype).itemsize
    nc_pad = _round_up(max(NC, _LANE), _LANE)
    nc_tile = _choose_nc_tile(H, W, OH, OW, nc_pad, itemsize)
    grid = (nc_pad // nc_tile,)

    # glue: NCHW -> (H, W, N*C), lane-padded to a multiple of 128.
    # TODO(synk): these transposes re-stream the tensor through HBM; fuse the
    # channels-last layout upstream in a real pipeline.
    x_k = jnp.transpose(x, (2, 3, 0, 1)).reshape(H, W, NC)
    if nc_pad != NC:
        x_k = jnp.pad(x_k, ((0, 0), (0, 0), (0, nc_pad - NC)))

    kernel = _make_maxpool_kernel(KH, KW, SH, SW, OH, OW)
    out_k = pl.pallas_call(
        kernel,
        out_shape=jax.ShapeDtypeStruct((OH, OW, nc_pad), x.dtype),
        grid=grid,
        in_specs=[pl.BlockSpec((H, W, nc_tile), lambda i: (0, 0, i))],
        out_specs=pl.BlockSpec((OH, OW, nc_tile), lambda i: (0, 0, i)),
        scratch_shapes=[pltpu.VMEM((W, nc_tile), x.dtype)],
        compiler_params=pltpu.CompilerParams(
            dimension_semantics=("parallel",)),
    )(x_k)

    # glue: (OH, OW, nc_pad) -> drop lane padding -> NCHW
    out_k = out_k[:, :, :NC]
    return jnp.transpose(out_k.reshape(OH, OW, N, C), (2, 3, 0, 1))


def roi_pooling_ref(x, output_shape):
    """Pure-JAX reference (matches torch.nn.functional.max_pool2d semantics)."""
    N, C, H, W = x.shape
    (KH, KW), (SH, SW), _ = _pool_params((H, W), output_shape)
    return jax.lax.reduce_window(
        x, -jnp.inf, jax.lax.max,
        window_dimensions=(1, 1, KH, KW),
        window_strides=(1, 1, SH, SW),
        padding="VALID",
    )


if __name__ == "__main__":
    key = jax.random.PRNGKey(0)
    x = jax.random.normal(key, (2, 4, 16, 16), dtype=jnp.float32)

    # Two configs: non-overlapping (kernel == stride) and overlapping
    # (kernel = ceil > stride = floor), derived exactly like the module.
    for out_shape in ((4, 4), (6, 6)):
        y = jax.block_until_ready(roi_pooling(x, out_shape))
        y_ref = roi_pooling_ref(x, out_shape)
        assert y.shape == y_ref.shape and y.dtype == y_ref.dtype
        np.testing.assert_array_equal(np.asarray(y), np.asarray(y_ref))

    print("KERNEL_OK")
</pallas_src>

<mosaic_0001>
module attributes {stable_mosaic.version = 11 : i64} {
  func.func @kernel(%arg0: i32, %arg1: memref<16x16x128xf32, #tpu.memory_space<vmem>>, %arg2: memref<4x4x128xf32, #tpu.memory_space<vmem>>, %arg3: memref<16x128xf32, #tpu.memory_space<vmem>>) attributes {dimension_semantics = [#tpu.dimension_semantics<parallel>], iteration_bounds = array<i64: 1>, scalar_prefetch = 0 : i64, scratch_operands = 1 : i64, tpu.core_type = #tpu.core_type<tc>, window_params = [{transform_indices = @transform_0, window_bounds = array<i64: 16, 16, 128>}, {transform_indices = @transform_1, window_bounds = array<i64: 4, 4, 128>}]} {
    %c0 = arith.constant 0 : index
    %c0_0 = arith.constant 0 : index
    %c0_1 = arith.constant 0 : index
    %0 = vector.load %arg1[%c0, %c0_0, %c0_1] : memref<16x16x128xf32, #tpu.memory_space<vmem>>, vector<1x16x128xf32>
    %1 = vector.shape_cast %0 : vector<1x16x128xf32> to vector<16x128xf32>
    %c1 = arith.constant 1 : index
    %c0_2 = arith.constant 0 : index
    %c0_3 = arith.constant 0 : index
    %2 = vector.load %arg1[%c1, %c0_2, %c0_3] : memref<16x16x128xf32, #tpu.memory_space<vmem>>, vector<1x16x128xf32>
    %3 = vector.shape_cast %2 : vector<1x16x128xf32> to vector<16x128xf32>
    %4 = arith.maximumf %1, %3 : vector<16x128xf32>
    %c2 = arith.constant 2 : index
    %c0_4 = arith.constant 0 : index
    %c0_5 = arith.constant 0 : index
    %5 = vector.load %arg1[%c2, %c0_4, %c0_5] : memref<16x16x128xf32, #tpu.memory_space<vmem>>, vector<1x16x128xf32>
    %6 = vector.shape_cast %5 : vector<1x16x128xf32> to vector<16x128xf32>
    %7 = arith.maximumf %4, %6 : vector<16x128xf32>
    %c3 = arith.constant 3 : index
    %c0_6 = arith.constant 0 : index
    %c0_7 = arith.constant 0 : index
    %8 = vector.load %arg1[%c3, %c0_6, %c0_7] : memref<16x16x128xf32, #tpu.memory_space<vmem>>, vector<1x16x128xf32>
    %9 = vector.shape_cast %8 : vector<1x16x128xf32> to vector<16x128xf32>
    %10 = arith.maximumf %7, %9 : vector<16x128xf32>
    %c0_8 = arith.constant 0 : index
    %c0_9 = arith.constant 0 : index
    %11 = vector.load %arg3[%c0_8, %c0_9] : memref<16x128xf32, #tpu.memory_space<vmem>>, vector<16x128xf32>
    tpu.vector_store %arg3[%c0_8, %c0_9], %10 {strides = array<i32>} : memref<16x128xf32, #tpu.memory_space<vmem>>, vector<16x128xf32>,
    %c0_10 = arith.constant 0 : index
    %c0_11 = arith.constant 0 : index
    %12 = tpu.strided_load %arg3[%c0_10, %c0_11] {strides = array<i32: 4, 1>} : memref<16x128xf32, #tpu.memory_space<vmem>>, vector<4x128xf32>
    %c1_12 = arith.constant 1 : index
    %c0_13 = arith.constant 0 : index
    %13 = tpu.strided_load %arg3[%c1_12, %c0_13] {strides = array<i32: 4, 1>} : memref<16x128xf32, #tpu.memory_space<vmem>>, vector<4x128xf32>
    %14 = arith.maximumf %12, %13 : vector<4x128xf32>
    %c2_14 = arith.constant 2 : index
    %c0_15 = arith.constant 0 : index
    %15 = tpu.strided_load %arg3[%c2_14, %c0_15] {strides = array<i32: 4, 1>} : memref<16x128xf32, #tpu.memory_space<vmem>>, vector<4x128xf32>
    %16 = arith.maximumf %14, %15 : vector<4x128xf32>
    %c3_16 = arith.constant 3 : index
    %c0_17 = arith.constant 0 : index
    %17 = tpu.strided_load %arg3[%c3_16, %c0_17] {strides = array<i32: 4, 1>} : memref<16x128xf32, #tpu.memory_space<vmem>>, vector<4x128xf32>
    %18 = arith.maximumf %16, %17 : vector<4x128xf32>
    %c4 = arith.constant 4 : index
    %c0_18 = arith.constant 0 : index
    %c0_19 = arith.constant 0 : index
    %19 = vector.load %arg1[%c4, %c0_18, %c0_19] : memref<16x16x128xf32, #tpu.memory_space<vmem>>, vector<1x16x128xf32>
    %20 = vector.shape_cast %19 : vector<1x16x128xf32> to vector<16x128xf32>
    %c5 = arith.constant 5 : index
    %c0_20 = arith.constant 0 : index
    %c0_21 = arith.constant 0 : index
    %21 = vector.load %arg1[%c5, %c0_20, %c0_21] : memref<16x16x128xf32, #tpu.memory_space<vmem>>, vector<1x16x128xf32>
    %22 = vector.shape_cast %21 : vector<1x16x128xf32> to vector<16x128xf32>
    %23 = arith.maximumf %20, %22 : vector<16x128xf32>
    %c6 = arith.constant 6 : index
    %c0_22 = arith.constant 0 : index
    %c0_23 = arith.constant 0 : index
    %24 = vector.load %arg1[%c6, %c0_22, %c0_23] : memref<16x16x128xf32, #tpu.memory_space<vmem>>, vector<1x16x128xf32>
    %25 = vector.shape_cast %24 : vector<1x16x128xf32> to vector<16x128xf32>
    %26 = arith.maximumf %23, %25 : vector<16x128xf32>
    %c7 = arith.constant 7 : index
    %c0_24 = arith.constant 0 : index
    %c0_25 = arith.constant 0 : index
    %27 = vector.load %arg1[%c7, %c0_24, %c0_25] : memref<16x16x128xf32, #tpu.memory_space<vmem>>, vector<1x16x128xf32>
    %28 = vector.shape_cast %27 : vector<1x16x128xf32> to vector<16x128xf32>
    %29 = arith.maximumf %26, %28 : vector<16x128xf32>
    %c0_26 = arith.constant 0 : index
    %c0_27 = arith.constant 0 : index
    %30 = vector.load %arg3[%c0_26, %c0_27] : memref<16x128xf32, #tpu.memory_space<vmem>>, vector<16x128xf32>
    tpu.vector_store %arg3[%c0_26, %c0_27], %29 {strides = array<i32>} : memref<16x128xf32, #tpu.memory_space<vmem>>, vector<16x128xf32>,
    %c0_28 = arith.constant 0 : index
    %c0_29 = arith.constant 0 : index
    %31 = tpu.strided_load %arg3[%c0_28, %c0_29] {strides = array<i32: 4, 1>} : memref<16x128xf32, #tpu.memory_space<vmem>>, vector<4x128xf32>
    %c1_30 = arith.constant 1 : index
    %c0_31 = arith.constant 0 : index
    %32 = tpu.strided_load %arg3[%c1_30, %c0_31] {strides = array<i32: 4, 1>} : memref<16x128xf32, #tpu.memory_space<vmem>>, vector<4x128xf32>
    %33 = arith.maximumf %31, %32 : vector<4x128xf32>
    %c2_32 = arith.constant 2 : index
    %c0_33 = arith.constant 0 : index
    %34 = tpu.strided_load %arg3[%c2_32, %c0_33] {strides = array<i32: 4, 1>} : memref<16x128xf32, #tpu.memory_space<vmem>>, vector<4x128xf32>
    %35 = arith.maximumf %33, %34 : vector<4x128xf32>
    %c3_34 = arith.constant 3 : index
    %c0_35 = arith.constant 0 : index
    %36 = tpu.strided_load %arg3[%c3_34, %c0_35] {strides = array<i32: 4, 1>} : memref<16x128xf32, #tpu.memory_space<vmem>>, vector<4x128xf32>
    %37 = arith.maximumf %35, %36 : vector<4x128xf32>
    %c8 = arith.constant 8 : index
    %c0_36 = arith.constant 0 : index
    %c0_37 = arith.constant 0 : index
    %38 = vector.load %arg1[%c8, %c0_36, %c0_37] : memref<16x16x128xf32, #tpu.memory_space<vmem>>, vector<1x16x128xf32>
    %39 = vector.shape_cast %38 : vector<1x16x128xf32> to vector<16x128xf32>
    %c9 = arith.constant 9 : index
    %c0_38 = arith.constant 0 : index
    %c0_39 = arith.constant 0 : index
    %40 = vector.load %arg1[%c9, %c0_38, %c0_39] : memref<16x16x128xf32, #tpu.memory_space<vmem>>, vector<1x16x128xf32>
    %41 = vector.shape_cast %40 : vector<1x16x128xf32> to vector<16x128xf32>
    %42 = arith.maximumf %39, %41 : vector<16x128xf32>
    %c10 = arith.constant 10 : index
    %c0_40 = arith.constant 0 : index
    %c0_41 = arith.constant 0 : index
    %43 = vector.load %arg1[%c10, %c0_40, %c0_41] : memref<16x16x128xf32, #tpu.memory_space<vmem>>, vector<1x16x128xf32>
    %44 = vector.shape_cast %43 : vector<1x16x128xf32> to vector<16x128xf32>
    %45 = arith.maximumf %42, %44 : vector<16x128xf32>
    %c11 = arith.constant 11 : index
    %c0_42 = arith.constant 0 : index
    %c0_43 = arith.constant 0 : index
    %46 = vector.load %arg1[%c11, %c0_42, %c0_43] : memref<16x16x128xf32, #tpu.memory_space<vmem>>, vector<1x16x128xf32>
    %47 = vector.shape_cast %46 : vector<1x16x128xf32> to vector<16x128xf32>
    %48 = arith.maximumf %45, %47 : vector<16x128xf32>
    %c0_44 = arith.constant 0 : index
    %c0_45 = arith.constant 0 : index
    %49 = vector.load %arg3[%c0_44, %c0_45] : memref<16x128xf32, #tpu.memory_space<vmem>>, vector<16x128xf32>
    tpu.vector_store %arg3[%c0_44, %c0_45], %48 {strides = array<i32>} : memref<16x128xf32, #tpu.memory_space<vmem>>, vector<16x128xf32>,
    %c0_46 = arith.constant 0 : index
    %c0_47 = arith.constant 0 : index
    %50 = tpu.strided_load %arg3[%c0_46, %c0_47] {strides = array<i32: 4, 1>} : memref<16x128xf32, #tpu.memory_space<vmem>>, vector<4x128xf32>
    %c1_48 = arith.constant 1 : index
    %c0_49 = arith.constant 0 : index
    %51 = tpu.strided_load %arg3[%c1_48, %c0_49] {strides = array<i32: 4, 1>} : memref<16x128xf32, #tpu.memory_space<vmem>>, vector<4x128xf32>
    %52 = arith.maximumf %50, %51 : vector<4x128xf32>
    %c2_50 = arith.constant 2 : index
    %c0_51 = arith.constant 0 : index
    %53 = tpu.strided_load %arg3[%c2_50, %c0_51] {strides = array<i32: 4, 1>} : memref<16x128xf32, #tpu.memory_space<vmem>>, vector<4x128xf32>
    %54 = arith.maximumf %52, %53 : vector<4x128xf32>
    %c3_52 = arith.constant 3 : index
    %c0_53 = arith.constant 0 : index
    %55 = tpu.strided_load %arg3[%c3_52, %c0_53] {strides = array<i32: 4, 1>} : memref<16x128xf32, #tpu.memory_space<vmem>>, vector<4x128xf32>
    %56 = arith.maximumf %54, %55 : vector<4x128xf32>
    %c12 = arith.constant 12 : index
    %c0_54 = arith.constant 0 : index
    %c0_55 = arith.constant 0 : index
    %57 = vector.load %arg1[%c12, %c0_54, %c0_55] : memref<16x16x128xf32, #tpu.memory_space<vmem>>, vector<1x16x128xf32>
    %58 = vector.shape_cast %57 : vector<1x16x128xf32> to vector<16x128xf32>
    %c13 = arith.constant 13 : index
    %c0_56 = arith.constant 0 : index
    %c0_57 = arith.constant 0 : index
    %59 = vector.load %arg1[%c13, %c0_56, %c0_57] : memref<16x16x128xf32, #tpu.memory_space<vmem>>, vector<1x16x128xf32>
    %60 = vector.shape_cast %59 : vector<1x16x128xf32> to vector<16x128xf32>
    %61 = arith.maximumf %58, %60 : vector<16x128xf32>
    %c14 = arith.constant 14 : index
    %c0_58 = arith.constant 0 : index
    %c0_59 = arith.constant 0 : index
    %62 = vector.load %arg1[%c14, %c0_58, %c0_59] : memref<16x16x128xf32, #tpu.memory_space<vmem>>, vector<1x16x128xf32>
    %63 = vector.shape_cast %62 : vector<1x16x128xf32> to vector<16x128xf32>
    %64 = arith.maximumf %61, %63 : vector<16x128xf32>
    %c15 = arith.constant 15 : index
    %c0_60 = arith.constant 0 : index
    %c0_61 = arith.constant 0 : index
    %65 = vector.load %arg1[%c15, %c0_60, %c0_61] : memref<16x16x128xf32, #tpu.memory_space<vmem>>, vector<1x16x128xf32>
    %66 = vector.shape_cast %65 : vector<1x16x128xf32> to vector<16x128xf32>
    %67 = arith.maximumf %64, %66 : vector<16x128xf32>
    %c0_62 = arith.constant 0 : index
    %c0_63 = arith.constant 0 : index
    %68 = vector.load %arg3[%c0_62, %c0_63] : memref<16x128xf32, #tpu.memory_space<vmem>>, vector<16x128xf32>
    tpu.vector_store %arg3[%c0_62, %c0_63], %67 {strides = array<i32>} : memref<16x128xf32, #tpu.memory_space<vmem>>, vector<16x128xf32>,
    %c0_64 = arith.constant 0 : index
    %c0_65 = arith.constant 0 : index
    %69 = tpu.strided_load %arg3[%c0_64, %c0_65] {strides = array<i32: 4, 1>} : memref<16x128xf32, #tpu.memory_space<vmem>>, vector<4x128xf32>
    %c1_66 = arith.constant 1 : index
    %c0_67 = arith.constant 0 : index
    %70 = tpu.strided_load %arg3[%c1_66, %c0_67] {strides = array<i32: 4, 1>} : memref<16x128xf32, #tpu.memory_space<vmem>>, vector<4x128xf32>
    %71 = arith.maximumf %69, %70 : vector<4x128xf32>
    %c2_68 = arith.constant 2 : index
    %c0_69 = arith.constant 0 : index
    %72 = tpu.strided_load %arg3[%c2_68, %c0_69] {strides = array<i32: 4, 1>} : memref<16x128xf32, #tpu.memory_space<vmem>>, vector<4x128xf32>
    %73 = arith.maximumf %71, %72 : vector<4x128xf32>
    %c3_70 = arith.constant 3 : index
    %c0_71 = arith.constant 0 : index
    %74 = tpu.strided_load %arg3[%c3_70, %c0_71] {strides = array<i32: 4, 1>} : memref<16x128xf32, #tpu.memory_space<vmem>>, vector<4x128xf32>
    %75 = arith.maximumf %73, %74 : vector<4x128xf32>
    %76 = vector.shape_cast %18 : vector<4x128xf32> to vector<1x4x128xf32>
    %77 = vector.shape_cast %37 : vector<4x128xf32> to vector<1x4x128xf32>
    %78 = vector.shape_cast %56 : vector<4x128xf32> to vector<1x4x128xf32>
    %79 = vector.shape_cast %75 : vector<4x128xf32> to vector<1x4x128xf32>
    %80 = tpu.concatenate %76, %77, %78, %79 in 0 : vector<1x4x128xf32>, vector<1x4x128xf32>, vector<1x4x128xf32>, vector<1x4x128xf32> -> vector<4x4x128xf32>
    %c0_72 = arith.constant 0 : index
    %c0_73 = arith.constant 0 : index
    %c0_74 = arith.constant 0 : index
    %81 = vector.load %arg2[%c0_72, %c0_73, %c0_74] : memref<4x4x128xf32, #tpu.memory_space<vmem>>, vector<4x4x128xf32>
    tpu.vector_store %arg2[%c0_72, %c0_73, %c0_74], %80 {strides = array<i32>} : memref<4x4x128xf32, #tpu.memory_space<vmem>>, vector<4x4x128xf32>,
    return
  }
  func.func @transform_0(%arg0: i32) -> (i32, i32, i32) {
    %c0_i32 = arith.constant 0 : i32
    %c0_i32_0 = arith.constant 0 : i32
    %c0_i32_1 = arith.constant 0 : i32
    return %c0_i32, %c0_i32_0, %arg0 : i32, i32, i32
  }
  func.func @transform_1(%arg0: i32) -> (i32, i32, i32) {
    %c0_i32 = arith.constant 0 : i32
    %c0_i32_0 = arith.constant 0 : i32
    %c0_i32_1 = arith.constant 0 : i32
    return %c0_i32, %c0_i32_0, %arg0 : i32, i32, i32
  }
}

</mosaic_0001>

<llo_original>
// kernel: tpu_custom_call.1
$region0: #{tpu_custom_call.1}
  #allocation0 [shape = 'u32[]', space=smem, size = 0x4, offset = 0x4, fixed_abs, tag = 'smem constant byte address 0x4 - core index']
  #allocation1 [shape = 'u32[144,128]{1,0:T(1,128)}', space=vmem, size = 0x12000, scoped, tag = 'internal scratch']
  #allocation2 [shape = 'f32[16,128]{1,0:T(8,128)}', space=vmem, size = 0x2000, scoped, tag = 'scratch operand']
  %s0 = inlined_call_operand.hbm [shape: f32[16,16,128], index: 0, kind: input, shape index: {}]
  %s1 = inlined_call_operand.hbm [shape: f32[4,4,128], index: 1, kind: output, shape index: {}]
  %s2 = sld [smem:[#allocation0]]
  $region18: #{tpu_custom_call.1} parent=0
    _
  %s4 = ssub.s32 1, %s2
  %s5 = scalar_select 0, %s4, %s2
  $region1: #{tpu_custom_call.1} parent=0
    #allocation3 [shape = 'u8[131072]{0}', space=vmem, size = 0x20000, scoped, tag = 'input window, operand 0, single buffered']
    #allocation4 [shape = 's32[1]{0}', space=sflag, size = 0x4, scoped, tag = 'scoped memory for tpu_custom_call.1']
    #allocation5 [shape = 's32[1]{0}', space=sflag, size = 0x4, scoped, tag = 'scoped memory for tpu_custom_call.1']
    #allocation6 [shape = 'u8[8192]{0}', space=vmem, size = 0x2000, scoped, tag = 'output window, operand 0, single buffered']
    %6 = vsyncpa [#allocation4], 0
    %7 = vsyncpa [#allocation5], 0
    // Predicated region
    $region2: #{tpu_custom_call.1} parent=1 // pred_check
      _
    $region3: #{tpu_custom_call.1} parent=1 // pred_check_branch
      %9 = sbr.rel (0) target = $region5
    $region4: #{tpu_custom_call.1} parent=1 // pred_region
      %s11 = ssub.s32 4096, 4096
      %12 = vsyncadd [#allocation4], %s11
      %s13 = sshll.u32 [#allocation3], 4
      %s14 = int_to_ptr.vmem [resolvable:$true] %s13
      %19 = dma.hbm_to_vmem [thread:$0]  %s0, 4096, %s14, [#allocation4], 128, 128, 8
    $region5: #{tpu_custom_call.1} parent=1 // pred_fallthru
      _
    // Predicated region
    $region6: #{tpu_custom_call.1} parent=1 // pred_check
      _
    $region7: #{tpu_custom_call.1} parent=1 // pred_check_branch
      %21 = sbr.rel (0) target = $region9
    $region8: #{tpu_custom_call.1} parent=1 // pred_region
      %22 = dma.done [#allocation4], 4096
    $region9: #{tpu_custom_call.1} parent=1 // pred_fallthru
      _
    %v23 = vld [vmem:[#allocation3] sm:$0xff]
    %v24 = vld [vmem:[#allocation3 + $0x8] sm:$0xff]
    %s25 = scalar_lea.vmem [#allocation3], 16
    %v26 = vld [vmem:[%s25] sm:$0xff]
    %v27 = vld [vmem:[%s25 + $0x8] sm:$0xff]
    %v28 = vmax.f32 %v23, %v26
    %v29 = vmax.f32 %v24, %v27
    %s30 = scalar_lea.vmem [#allocation3], 32
    %v31 = vld [vmem:[%s30] sm:$0xff]
    %v32 = vld [vmem:[%s30 + $0x8] sm:$0xff]
    %v33 = vmax.f32 %v28, %v31
    %v34 = vmax.f32 %v29, %v32
    %s35 = scalar_lea.vmem [#allocation3], 48
    %v36 = vld [vmem:[%s35] sm:$0xff]
    %v37 = vld [vmem:[%s35 + $0x8] sm:$0xff]
    %v38 = vmax.f32 %v33, %v36
    %v39 = vmax.f32 %v34, %v37
    %40 = vst [vmem:[#allocation2] sm:$0xff] %v38
    %41 = vst [vmem:[#allocation2 + $0x8] sm:$0xff] %v39
    %v42 = vld [vmem:[#allocation2] ss:$4 sm:$0xf]
    %s43 = scalar_lea.vmem [#allocation2], 1
    %v44 = vld [vmem:[%s43] ss:$4 sm:$0xf]
    %v45 = vmax.f32 %v42, %v44
    %s46 = scalar_lea.vmem [#allocation2], 2
    %v47 = vld [vmem:[%s46] ss:$4 sm:$0xf]
    %v48 = vmax.f32 %v45, %v47
    %s49 = scalar_lea.vmem [#allocation2], 3
    %v50 = vld [vmem:[%s49] ss:$4 sm:$0xf]
    %v51 = vmax.f32 %v48, %v50
    %s52 = scalar_lea.vmem [#allocation3], 64
    %v53 = vld [vmem:[%s52] sm:$0xff]
    %v54 = vld [vmem:[%s52 + $0x8] sm:$0xff]
    %s55 = scalar_lea.vmem [#allocation3], 80
    %v56 = vld [vmem:[%s55] sm:$0xff]
    %v57 = vld [vmem:[%s55 + $0x8] sm:$0xff]
    %v58 = vmax.f32 %v53, %v56
    %v59 = vmax.f32 %v54, %v57
    %s60 = scalar_lea.vmem [#allocation3], 96
    %v61 = vld [vmem:[%s60] sm:$0xff]
    %v62 = vld [vmem:[%s60 + $0x8] sm:$0xff]
    %v63 = vmax.f32 %v58, %v61
    %v64 = vmax.f32 %v59, %v62
    %s65 = scalar_lea.vmem [#allocation3], 112
    %v66 = vld [vmem:[%s65] sm:$0xff]
    %v67 = vld [vmem:[%s65 + $0x8] sm:$0xff]
    %v68 = vmax.f32 %v63, %v66
    %v69 = vmax.f32 %v64, %v67
    %70 = vst [vmem:[#allocation2] sm:$0xff] %v68
    %71 = vst [vmem:[#allocation2 + $0x8] sm:$0xff] %v69
    %v72 = vld [vmem:[#allocation2] ss:$4 sm:$0xf]
    %v73 = vld [vmem:[%s43] ss:$4 sm:$0xf]
    %v74 = vmax.f32 %v72, %v73
    %v75 = vld [vmem:[%s46] ss:$4 sm:$0xf]
    %v76 = vmax.f32 %v74, %v75
    %v77 = vld [vmem:[%s49] ss:$4 sm:$0xf]
    %v78 = vmax.f32 %v76, %v77
    %s79 = scalar_lea.vmem [#allocation3], 128
    %v80 = vld [vmem:[%s79] sm:$0xff]
    %v81 = vld [vmem:[%s79 + $0x8] sm:$0xff]
    %s82 = scalar_lea.vmem [#allocation3], 144
    %v83 = vld [vmem:[%s82] sm:$0xff]
    %v84 = vld [vmem:[%s82 + $0x8] sm:$0xff]
    %v85 = vmax.f32 %v80, %v83
    %v86 = vmax.f32 %v81, %v84
    %s87 = scalar_lea.vmem [#allocation3], 160
    %v88 = vld [vmem:[%s87] sm:$0xff]
    %v89 = vld [vmem:[%s87 + $0x8] sm:$0xff]
    %v90 = vmax.f32 %v85, %v88
    %v91 = vmax.f32 %v86, %v89
    %s92 = scalar_lea.vmem [#allocation3], 176
    %v93 = vld [vmem:[%s92] sm:$0xff]
    %v94 = vld [vmem:[%s92 + $0x8] sm:$0xff]
    %v95 = vmax.f32 %v90, %v93
    %v96 = vmax.f32 %v91, %v94
    %97 = vst [vmem:[#allocation2] sm:$0xff] %v95
    %98 = vst [vmem:[#allocation2 + $0x8] sm:$0xff] %v96
    %v99 = vld [vmem:[#allocation2] ss:$4 sm:$0xf]
    %v100 = vld [vmem:[%s43] ss:$4 sm:$0xf]
    %v101 = vmax.f32 %v99, %v100
    %v102 = vld [vmem:[%s46] ss:$4 sm:$0xf]
    %v103 = vmax.f32 %v101, %v102
    %v104 = vld [vmem:[%s49] ss:$4 sm:$0xf]
    %v105 = vmax.f32 %v103, %v104
    %s106 = scalar_lea.vmem [#allocation3], 192
    %v107 = vld [vmem:[%s106] sm:$0xff]
    %v108 = vld [vmem:[%s106 + $0x8] sm:$0xff]
    %s109 = scalar_lea.vmem [#allocation3], 208
    %v110 = vld [vmem:[%s109] sm:$0xff]
    %v111 = vld [vmem:[%s109 + $0x8] sm:$0xff]
    %v112 = vmax.f32 %v107, %v110
    %v113 = vmax.f32 %v108, %v111
    %s114 = scalar_lea.vmem [#allocation3], 224
    %v115 = vld [vmem:[%s114] sm:$0xff]
    %v116 = vld [vmem:[%s114 + $0x8] sm:$0xff]
    %v117 = vmax.f32 %v112, %v115
    %v118 = vmax.f32 %v113, %v116
    %s119 = scalar_lea.vmem [#allocation3], 240
    %v120 = vld [vmem:[%s119] sm:$0xff]
    %v121 = vld [vmem:[%s119 + $0x8] sm:$0xff]
    %v122 = vmax.f32 %v117, %v120
    %v123 = vmax.f32 %v118, %v121
    %124 = vst [vmem:[#allocation2] sm:$0xff] %v122
    %125 = vst [vmem:[#allocation2 + $0x8] sm:$0xff] %v123
    %v126 = vld [vmem:[#allocation2] ss:$4 sm:$0xf]
    %v127 = vld [vmem:[%s43] ss:$4 sm:$0xf]
    %v128 = vmax.f32 %v126, %v127
    %v129 = vld [vmem:[%s46] ss:$4 sm:$0xf]
    %v130 = vmax.f32 %v128, %v129
    %v131 = vld [vmem:[%s49] ss:$4 sm:$0xf]
    %v132 = vmax.f32 %v130, %v131
    %133 = vst [vmem:[#allocation6] sm:$0xf] %v51
    %134 = vst [vmem:[#allocation6 + $0x4] sm:$0xf] %v78
    %135 = vst [vmem:[#allocation6 + $0x8] sm:$0xf] %v105
    %136 = vst [vmem:[#allocation6 + $0xc] sm:$0xf] %v132
    // Predicated region
    $region10: #{tpu_custom_call.1} parent=1 // pred_check
      _
    $region11: #{tpu_custom_call.1} parent=1 // pred_check_branch
      %138 = sbr.rel (0) target = $region13
    $region12: #{tpu_custom_call.1} parent=1 // pred_region
      %s140 = ssub.s32 256, 256
      %141 = vsyncadd [#allocation5], %s140
      %s142 = sshll.u32 [#allocation6], 4
      %s143 = int_to_ptr.vmem [resolvable:$true] %s142
      %148 = dma.vmem_to_hbm [thread:$0]  %s143, 256, %s1, [#allocation5], 64, 64, 4
    $region13: #{tpu_custom_call.1} parent=1 // pred_fallthru
      _
    // Predicated region
    $region14: #{tpu_custom_call.1} parent=1 // pred_check
      _
    $region15: #{tpu_custom_call.1} parent=1 // pred_check_branch
      %150 = sbr.rel (0) target = $region17
    $region16: #{tpu_custom_call.1} parent=1 // pred_region
      %151 = dma.done [#allocation5], 256
    $region17: #{tpu_custom_call.1} parent=1 // pred_fallthru
      _
    %152 = vsyncpa [#allocation4], 1
    %153 = vsyncpa [#allocation5], 1

</llo_original>
